<compile_context>
chip_gen: v7x
topology: tpu7x:2x2x1
jax: 0.10.0
libtpu: 0.0.40
codegen_flags: <defaults>
</compile_context>

<pallas_src>
import functools

import jax
import jax.numpy as jnp
from jax.experimental import pallas as pl
from jax.experimental.pallas import tpu as pltpu

WEIGHT_AGE = 1.0
WEIGHT_GENDER = 0.5
NUM_CLASSES_AGE = 96            # CORAL predicts num_classes - 1 = 95 binary thresholds
NUM_THRESH = NUM_CLASSES_AGE - 1
NUM_CLASSES_GENDER = 2
IGNORE_INDEX = 255


def _round_up(x, m):
    return (x + m - 1) // m * m


def _medical_meta_loss_kernel(la_ref, lg_ref, age_ref, gen_ref, out_ref, acc_ref,
                              *, b_actual, partial_last):
    pid = pl.program_id(0)
    nprog = pl.num_programs(0)

    @pl.when(pid == 0)
    def _init():
        acc_ref[0] = 0.0    # running -sum(CORAL term)
        acc_ref[1] = 0.0    # running sum of per-sample gender CE (valid rows only)
        acc_ref[2] = 0.0    # running count of valid gender rows

    la = la_ref[...].astype(jnp.float32)             # (TILE_B, 95), upcast in-kernel
    tb, nk = la.shape
    age = age_ref[...]                               # (TILE_B, 1) int32
    gender = gen_ref[...]                            # (TILE_B, 1) int32

    # Rows that fall past the real batch in the (possibly partial) last block carry
    # unspecified data; mask them with a select (never a multiply) so garbage can
    # never poison the sums.
    if partial_last:
        row = jax.lax.broadcasted_iota(jnp.int32, (tb, 1), 0) + pid * tb
        in_bounds = row < b_actual                   # (TILE_B, 1) bool
    else:
        in_bounds = None

    # ---------------- CORAL ordinal loss (age), simplified form ----------------
    #   logsig*lvl + (logsig - z)*(1 - lvl) == logsig - z + where(age > k, z, 0)
    k_iota = jax.lax.broadcasted_iota(jnp.int32, (tb, nk), 1)
    logsig = jnp.minimum(la, 0.0) - jnp.log1p(jnp.exp(-jnp.abs(la)))
    term = logsig - la + jnp.where(age > k_iota, la, 0.0)
    if partial_last:
        term = jnp.where(in_bounds, term, 0.0)
    acc_ref[0] += -jnp.sum(term)

    # -------- CrossEntropy with ignore_index (gender), binary margin form --------
    #   ce = logsumexp(z) - z_target = softplus(z_other - z_target)
    lg = lg_ref[...].astype(jnp.float32)             # (TILE_B, 2)
    margin = jnp.where(gender == 1,
                       lg[:, 1:2] - lg[:, 0:1],
                       lg[:, 0:1] - lg[:, 1:2])      # z_target - z_other, (TILE_B, 1)
    # stable softplus(-margin) = max(-margin, 0) + log1p(exp(-|margin|))
    ce = jnp.maximum(-margin, 0.0) + jnp.log1p(jnp.exp(-jnp.abs(margin)))
    valid = gender != IGNORE_INDEX
    if partial_last:
        valid = jnp.logical_and(valid, in_bounds)
    acc_ref[1] += jnp.sum(jnp.where(valid, ce, 0.0))
    acc_ref[2] += jnp.sum(valid.astype(jnp.float32))

    @pl.when(pid == nprog - 1)
    def _finalize():
        loss_age = acc_ref[0] * (WEIGHT_AGE / b_actual)
        # Matches torch CrossEntropyLoss: mean over non-ignored samples (NaN if none).
        loss_gender = (acc_ref[1] / acc_ref[2]) * WEIGHT_GENDER
        out_ref[0] = loss_age + loss_gender
        out_ref[1] = loss_age
        out_ref[2] = loss_gender


@functools.partial(jax.jit, static_argnames=("tile_b",))
def medical_meta_loss(logit_age, age, logit_gender, gender, *, tile_b=None):
    b = logit_age.shape[0]
    if tile_b is None:
        # ~200 KiB-class logit tiles: pipelines DMA/compute and stays far below the
        # scoped-VMEM limit (incl. double buffering) on v5e/v6e/v7x.
        tile_b = min(512, _round_up(b, 8))
    assert tile_b % 8 == 0, "tile_b must be a multiple of 8 (sublane tiling)"

    # Integer targets as (B, 1) views -> tiny VMEM streams, no stack/concat copies.
    age2d = age.astype(jnp.int32).reshape(b, 1)
    gen2d = gender.astype(jnp.int32).reshape(b, 1)

    grid = (pl.cdiv(b, tile_b),)
    partial_last = (b % tile_b) != 0
    kernel = functools.partial(_medical_meta_loss_kernel,
                               b_actual=b, partial_last=partial_last)

    out = pl.pallas_call(
        kernel,
        out_shape=jax.ShapeDtypeStruct((3,), jnp.float32),
        grid=grid,
        in_specs=[
            pl.BlockSpec((tile_b, NUM_THRESH), lambda i: (i, 0)),          # logit_age
            pl.BlockSpec((tile_b, NUM_CLASSES_GENDER), lambda i: (i, 0)),  # logit_gender
            pl.BlockSpec((tile_b, 1), lambda i: (i, 0)),                   # age
            pl.BlockSpec((tile_b, 1), lambda i: (i, 0)),                   # gender
        ],
        out_specs=pl.BlockSpec(memory_space=pltpu.MemorySpace.SMEM),
        scratch_shapes=[pltpu.SMEM((3,), jnp.float32)],
        compiler_params=pltpu.CompilerParams(
            dimension_semantics=("arbitrary",)),   # accumulator across batch tiles
    )(logit_age, logit_gender, age2d, gen2d)
    return {"loss": out[0], "loss_age": out[1], "loss_gender": out[2]}


def medical_meta_loss_ref(logit_age, age, logit_gender, gender):
    """Pure-JAX reference mirroring the PyTorch module semantics."""
    logit_age = logit_age.astype(jnp.float32)
    logit_gender = logit_gender.astype(jnp.float32)
    levels = (age[:, None] > jnp.arange(NUM_THRESH)).astype(jnp.float32)
    logsig = jax.nn.log_sigmoid(logit_age)
    term = logsig * levels + (logsig - logit_age) * (1.0 - levels)
    loss_age = jnp.mean(-jnp.sum(term, axis=1)) * WEIGHT_AGE

    valid = gender != IGNORE_INDEX
    logp = jax.nn.log_softmax(logit_gender, axis=1)
    safe_tgt = jnp.where(valid, gender, 0)
    picked = jnp.take_along_axis(logp, safe_tgt[:, None], axis=1)[:, 0]
    ce = jnp.where(valid, -picked, 0.0)
    loss_gender = (jnp.sum(ce) / jnp.sum(valid.astype(jnp.float32))) * WEIGHT_GENDER
    loss = loss_age + loss_gender
    return {"loss": loss, "loss_age": loss_age, "loss_gender": loss_gender}


def _check(out, ref, tag, rtol=1e-5, atol=1e-5):
    for name in ("loss", "loss_age", "loss_gender"):
        assert jnp.allclose(out[name], ref[name], rtol=rtol, atol=atol), (
            tag, name, out[name], ref[name])


if __name__ == "__main__":
    key = jax.random.PRNGKey(0)
    k1, k2, k3, k4, k5, k6, k7, k8 = jax.random.split(key, 8)

    # ---- Case 1: B multiple of 8, single full tile, f32 logits ----
    B = 8
    logit_age = jax.random.normal(k1, (B, NUM_THRESH), dtype=jnp.float32)
    logit_gender = jax.random.normal(k2, (B, NUM_CLASSES_GENDER), dtype=jnp.float32)
    age = jax.random.randint(k3, (B,), 0, NUM_CLASSES_AGE, dtype=jnp.int32)
    gender = jax.random.randint(k4, (B,), 0, NUM_CLASSES_GENDER, dtype=jnp.int32)
    gender = gender.at[3].set(IGNORE_INDEX)   # exercise ignore_index=255 path

    out1 = medical_meta_loss(logit_age, age, logit_gender, gender)
    out1 = jax.tree_util.tree_map(jax.block_until_ready, out1)
    _check(out1, medical_meta_loss_ref(logit_age, age, logit_gender, gender), "case1")

    # ---- Case 2: ragged batch -> multi-step accumulator grid + partial last block ----
    B2 = 13
    la2 = jax.random.normal(k5, (B2, NUM_THRESH), dtype=jnp.float32)
    lg2 = jax.random.normal(k6, (B2, NUM_CLASSES_GENDER), dtype=jnp.float32)
    age2 = jax.random.randint(k7, (B2,), 0, NUM_CLASSES_AGE, dtype=jnp.int32)
    gen2 = jax.random.randint(k8, (B2,), 0, NUM_CLASSES_GENDER, dtype=jnp.int32)
    gen2 = gen2.at[5].set(IGNORE_INDEX)

    out2 = medical_meta_loss(la2, age2, lg2, gen2, tile_b=8)   # grid=(2,), last block partial
    out2 = jax.tree_util.tree_map(jax.block_until_ready, out2)
    _check(out2, medical_meta_loss_ref(la2, age2, lg2, gen2), "case2")

    # ---- Case 3: bf16 logits fed straight into the kernel (no wrapper upcast) ----
    la_bf = logit_age.astype(jnp.bfloat16)
    lg_bf = logit_gender.astype(jnp.bfloat16)
    out3 = medical_meta_loss(la_bf, age, lg_bf, gender)
    out3 = jax.tree_util.tree_map(jax.block_until_ready, out3)
    ref3 = medical_meta_loss_ref(la_bf.astype(jnp.float32), age,
                                 lg_bf.astype(jnp.float32), gender)
    _check(out3, ref3, "case3_bf16", rtol=1e-4, atol=1e-4)

    print("KERNEL_OK")
</pallas_src>

<mosaic_0001>
module attributes {stable_mosaic.version = 11 : i64} {
  func.func @_medical_meta_loss_kernel(%arg0: i32, %arg1: memref<8x95xf32, #tpu.memory_space<vmem>>, %arg2: memref<8x2xf32, #tpu.memory_space<vmem>>, %arg3: memref<8x1xi32, #tpu.memory_space<vmem>>, %arg4: memref<8x1xi32, #tpu.memory_space<vmem>>, %arg5: memref<3xf32, #tpu.memory_space<smem>>, %arg6: memref<3xf32, #tpu.memory_space<smem>>) attributes {dimension_semantics = [#tpu.dimension_semantics<arbitrary>], iteration_bounds = array<i64: 1>, scalar_prefetch = 0 : i64, scratch_operands = 1 : i64, tpu.core_type = #tpu.core_type<tc>, window_params = [{transform_indices = @transform_0, window_bounds = array<i64: 8, 95>}, {transform_indices = @transform_1, window_bounds = array<i64: 8, 2>}, {transform_indices = @transform_2, window_bounds = array<i64: 8, 1>}, {transform_indices = @transform_3, window_bounds = array<i64: 8, 1>}, {transform_indices = @transform_4, window_bounds = array<i64: 3>}]} {
    %c0_i32 = arith.constant 0 : i32
    %0 = arith.cmpi eq, %arg0, %c0_i32 : i32
    %1 = arith.extui %0 : i1 to i32
    %c0_i32_0 = arith.constant 0 : i32
    %2 = arith.cmpi ne, %1, %c0_i32_0 : i32
    scf.if %2 {
      %cst_24 = arith.constant 0.000000e+00 : f32
      %c0_25 = arith.constant 0 : index
      %72 = memref.load %arg6[%c0_25] : memref<3xf32, #tpu.memory_space<smem>>
      memref.store %cst_24, %arg6[%c0_25] : memref<3xf32, #tpu.memory_space<smem>>
      %cst_26 = arith.constant 0.000000e+00 : f32
      %c1_27 = arith.constant 1 : index
      %73 = memref.load %arg6[%c1_27] : memref<3xf32, #tpu.memory_space<smem>>
      memref.store %cst_26, %arg6[%c1_27] : memref<3xf32, #tpu.memory_space<smem>>
      %cst_28 = arith.constant 0.000000e+00 : f32
      %c2_29 = arith.constant 2 : index
      %74 = memref.load %arg6[%c2_29] : memref<3xf32, #tpu.memory_space<smem>>
      memref.store %cst_28, %arg6[%c2_29] : memref<3xf32, #tpu.memory_space<smem>>
    } else {
    }
    %c0 = arith.constant 0 : index
    %c0_1 = arith.constant 0 : index
    %3 = vector.load %arg1[%c0, %c0_1] : memref<8x95xf32, #tpu.memory_space<vmem>>, vector<8x95xf32>
    %c0_2 = arith.constant 0 : index
    %c0_3 = arith.constant 0 : index
    %4 = vector.load %arg3[%c0_2, %c0_3] : memref<8x1xi32, #tpu.memory_space<vmem>>, vector<8x1xi32>
    %c0_4 = arith.constant 0 : index
    %c0_5 = arith.constant 0 : index
    %5 = vector.load %arg4[%c0_4, %c0_5] : memref<8x1xi32, #tpu.memory_space<vmem>>, vector<8x1xi32>
    %6 = tpu.iota {dimensions = array<i32: 1>} : vector<8x95xi32>
    %cst = arith.constant 0.000000e+00 : f32
    %7 = vector.broadcast %cst : f32 to vector<8x95xf32>
    %8 = arith.minimumf %3, %7 : vector<8x95xf32>
    %9 = math.absf %3 : vector<8x95xf32>
    %cst_6 = arith.constant 0.000000e+00 : f32
    %10 = vector.broadcast %cst_6 : f32 to vector<8x95xf32>
    %11 = arith.subf %10, %9 : vector<8x95xf32>
    %12 = math.exp %11 : vector<8x95xf32>
    %13 = math.log1p %12 : vector<8x95xf32>
    %14 = arith.subf %8, %13 : vector<8x95xf32>
    %15 = arith.subf %14, %3 : vector<8x95xf32>
    %16 = vector.broadcast %4 : vector<8x1xi32> to vector<8x95xi32>
    %17 = arith.cmpi sgt, %16, %6 : vector<8x95xi32>
    %cst_7 = arith.constant 0.000000e+00 : f32
    %18 = vector.broadcast %cst_7 : f32 to vector<8x95xf32>
    %19 = arith.select %17, %3, %18 : vector<8x95xi1>, vector<8x95xf32>
    %20 = arith.addf %15, %19 : vector<8x95xf32>
    %c0_8 = arith.constant 0 : index
    %21 = memref.load %arg6[%c0_8] : memref<3xf32, #tpu.memory_space<smem>>
    %22 = vector.shape_cast %20 : vector<8x95xf32> to vector<1x8x95xf32>
    %cst_9 = arith.constant dense<0.000000e+00> : vector<1xf32>
    %23 = vector.multi_reduction <add>, %22, %cst_9 [1, 2] : vector<1x8x95xf32> to vector<1xf32>
    %24 = vector.shape_cast %23 : vector<1xf32> to vector<1x1x1xf32>
    %25 = vector.extract %24[0, 0, 0] : f32 from vector<1x1x1xf32>
    %cst_10 = arith.constant 0.000000e+00 : f32
    %26 = arith.subf %cst_10, %25 : f32
    %27 = arith.addf %21, %26 : f32
    %c0_11 = arith.constant 0 : index
    %28 = memref.load %arg6[%c0_11] : memref<3xf32, #tpu.memory_space<smem>>
    memref.store %27, %arg6[%c0_11] : memref<3xf32, #tpu.memory_space<smem>>
    %c0_12 = arith.constant 0 : index
    %c0_13 = arith.constant 0 : index
    %29 = vector.load %arg2[%c0_12, %c0_13] : memref<8x2xf32, #tpu.memory_space<vmem>>, vector<8x2xf32>
    %c1_i32 = arith.constant 1 : i32
    %30 = vector.broadcast %c1_i32 : i32 to vector<8x1xi32>
    %31 = arith.cmpi eq, %5, %30 : vector<8x1xi32>
    %32 = vector.extract_strided_slice %29 {offsets = [0, 1], sizes = [8, 1], strides = [1, 1]} : vector<8x2xf32> to vector<8x1xf32>
    %33 = vector.extract_strided_slice %29 {offsets = [0, 0], sizes = [8, 1], strides = [1, 1]} : vector<8x2xf32> to vector<8x1xf32>
    %34 = arith.subf %32, %33 : vector<8x1xf32>
    %35 = vector.extract_strided_slice %29 {offsets = [0, 0], sizes = [8, 1], strides = [1, 1]} : vector<8x2xf32> to vector<8x1xf32>
    %36 = vector.extract_strided_slice %29 {offsets = [0, 1], sizes = [8, 1], strides = [1, 1]} : vector<8x2xf32> to vector<8x1xf32>
    %37 = arith.subf %35, %36 : vector<8x1xf32>
    %38 = arith.select %31, %34, %37 : vector<8x1xi1>, vector<8x1xf32>
    %cst_14 = arith.constant 0.000000e+00 : f32
    %39 = vector.broadcast %cst_14 : f32 to vector<8x1xf32>
    %40 = arith.subf %39, %38 : vector<8x1xf32>
    %cst_15 = arith.constant 0.000000e+00 : f32
    %41 = vector.broadcast %cst_15 : f32 to vector<8x1xf32>
    %42 = arith.maximumf %40, %41 : vector<8x1xf32>
    %43 = math.absf %38 : vector<8x1xf32>
    %cst_16 = arith.constant 0.000000e+00 : f32
    %44 = vector.broadcast %cst_16 : f32 to vector<8x1xf32>
    %45 = arith.subf %44, %43 : vector<8x1xf32>
    %46 = math.exp %45 : vector<8x1xf32>
    %47 = math.log1p %46 : vector<8x1xf32>
    %48 = arith.addf %42, %47 : vector<8x1xf32>
    %c255_i32 = arith.constant 255 : i32
    %49 = vector.broadcast %c255_i32 : i32 to vector<8x1xi32>
    %50 = arith.cmpi ne, %5, %49 : vector<8x1xi32>
    %c1 = arith.constant 1 : index
    %51 = memref.load %arg6[%c1] : memref<3xf32, #tpu.memory_space<smem>>
    %cst_17 = arith.constant 0.000000e+00 : f32
    %52 = vector.broadcast %cst_17 : f32 to vector<8x1xf32>
    %53 = arith.select %50, %48, %52 : vector<8x1xi1>, vector<8x1xf32>
    %54 = vector.shape_cast %53 : vector<8x1xf32> to vector<1x8x1xf32>
    %cst_18 = arith.constant dense<0.000000e+00> : vector<1xf32>
    %55 = vector.multi_reduction <add>, %54, %cst_18 [1, 2] : vector<1x8x1xf32> to vector<1xf32>
    %56 = vector.shape_cast %55 : vector<1xf32> to vector<1x1x1xf32>
    %57 = vector.extract %56[0, 0, 0] : f32 from vector<1x1x1xf32>
    %58 = arith.addf %51, %57 : f32
    %c1_19 = arith.constant 1 : index
    %59 = memref.load %arg6[%c1_19] : memref<3xf32, #tpu.memory_space<smem>>
    memref.store %58, %arg6[%c1_19] : memref<3xf32, #tpu.memory_space<smem>>
    %c2 = arith.constant 2 : index
    %60 = memref.load %arg6[%c2] : memref<3xf32, #tpu.memory_space<smem>>
    %61 = arith.extui %50 : vector<8x1xi1> to vector<8x1xi32>
    %62 = arith.sitofp %61 : vector<8x1xi32> to vector<8x1xf32>
    %63 = vector.shape_cast %62 : vector<8x1xf32> to vector<1x8x1xf32>
    %cst_20 = arith.constant dense<0.000000e+00> : vector<1xf32>
    %64 = vector.multi_reduction <add>, %63, %cst_20 [1, 2] : vector<1x8x1xf32> to vector<1xf32>
    %65 = vector.shape_cast %64 : vector<1xf32> to vector<1x1x1xf32>
    %66 = vector.extract %65[0, 0, 0] : f32 from vector<1x1x1xf32>
    %67 = arith.addf %60, %66 : f32
    %c2_21 = arith.constant 2 : index
    %68 = memref.load %arg6[%c2_21] : memref<3xf32, #tpu.memory_space<smem>>
    memref.store %67, %arg6[%c2_21] : memref<3xf32, #tpu.memory_space<smem>>
    %c0_i32_22 = arith.constant 0 : i32
    %69 = arith.cmpi eq, %arg0, %c0_i32_22 : i32
    %70 = arith.extui %69 : i1 to i32
    %c0_i32_23 = arith.constant 0 : i32
    %71 = arith.cmpi ne, %70, %c0_i32_23 : i32
    scf.if %71 {
      %c0_24 = arith.constant 0 : index
      %72 = memref.load %arg6[%c0_24] : memref<3xf32, #tpu.memory_space<smem>>
      %cst_25 = arith.constant 1.250000e-01 : f32
      %73 = arith.mulf %72, %cst_25 : f32
      %c1_26 = arith.constant 1 : index
      %74 = memref.load %arg6[%c1_26] : memref<3xf32, #tpu.memory_space<smem>>
      %c2_27 = arith.constant 2 : index
      %75 = memref.load %arg6[%c2_27] : memref<3xf32, #tpu.memory_space<smem>>
      %76 = arith.divf %74, %75 : f32
      %cst_28 = arith.constant 5.000000e-01 : f32
      %77 = arith.mulf %76, %cst_28 : f32
      %78 = arith.addf %73, %77 : f32
      %c0_29 = arith.constant 0 : index
      %79 = memref.load %arg5[%c0_29] : memref<3xf32, #tpu.memory_space<smem>>
      memref.store %78, %arg5[%c0_29] : memref<3xf32, #tpu.memory_space<smem>>
      %c1_30 = arith.constant 1 : index
      %80 = memref.load %arg5[%c1_30] : memref<3xf32, #tpu.memory_space<smem>>
      memref.store %73, %arg5[%c1_30] : memref<3xf32, #tpu.memory_space<smem>>
      %c2_31 = arith.constant 2 : index
      %81 = memref.load %arg5[%c2_31] : memref<3xf32, #tpu.memory_space<smem>>
      memref.store %77, %arg5[%c2_31] : memref<3xf32, #tpu.memory_space<smem>>
    } else {
    }
    return
  }
  func.func @transform_0(%arg0: i32) -> (i32, i32) {
    %c0_i32 = arith.constant 0 : i32
    %c0_i32_0 = arith.constant 0 : i32
    return %arg0, %c0_i32 : i32, i32
  }
  func.func @transform_1(%arg0: i32) -> (i32, i32) {
    %c0_i32 = arith.constant 0 : i32
    %c0_i32_0 = arith.constant 0 : i32
    return %arg0, %c0_i32 : i32, i32
  }
  func.func @transform_2(%arg0: i32) -> (i32, i32) {
    %c0_i32 = arith.constant 0 : i32
    %c0_i32_0 = arith.constant 0 : i32
    return %arg0, %c0_i32 : i32, i32
  }
  func.func @transform_3(%arg0: i32) -> (i32, i32) {
    %c0_i32 = arith.constant 0 : i32
    %c0_i32_0 = arith.constant 0 : i32
    return %arg0, %c0_i32 : i32, i32
  }
  func.func @transform_4(%arg0: i32) -> i32 {
    %c0_i32 = arith.constant 0 : i32
    %c0_i32_0 = arith.constant 0 : i32
    return %c0_i32 : i32
  }
}

</mosaic_0001>

<llo_original>
// kernel: medical_meta_loss.1
$region0: #{medical_meta_loss.1}
  #allocation0 [shape = 'u32[]', space=smem, size = 0x4, offset = 0x4, fixed_abs, tag = 'smem constant byte address 0x4 - core index']
  #allocation1 [shape = 'u32[144,128]{1,0:T(1,128)}', space=vmem, size = 0x12000, scoped, tag = 'internal scratch']
  #allocation2 [shape = 'f32[3]{0:T(128)}', space=smem, size = 0x200, scoped, tag = 'scratch operand']
  %s0 = inlined_call_operand.vmem [shape: f32[8,95], index: 0, kind: input, shape index: {}]
  %s1 = inlined_call_operand.vmem [shape: f32[8,2], index: 1, kind: input, shape index: {}]
  %s2 = inlined_call_operand.vmem [shape: s32[8,1], index: 2, kind: input, shape index: {}]
  %s3 = inlined_call_operand.vmem [shape: s32[8,1], index: 3, kind: input, shape index: {}]
  %s4 = inlined_call_operand.vmem [shape: f32[3], index: 4, kind: output, shape index: {}]
  %s5 = sld [smem:[#allocation0]]
  $region34: #{medical_meta_loss.1} parent=0
    _
  %s7 = ssub.s32 1, %s5
  %s8 = scalar_select 0, %s7, %s5
  $region1: #{medical_meta_loss.1} parent=0
    #allocation3 [shape = 'u8[512]{0}', space=smem, size = 0x200, scoped, tag = 'output window, operand 0, single buffered']
    #allocation4 [shape = 's32[1]{0}', space=sflag, size = 0x4, scoped, tag = 'scoped memory for medical_meta_loss.1']
    %9 = vsyncpa [#allocation4], 0
    // Predicated region
    $region2: #{medical_meta_loss.1} parent=1 // pred_check
      _
    $region3: #{medical_meta_loss.1} parent=1 // pred_check_branch
      %11 = sbr.rel (0) target = $region5
    $region4: #{medical_meta_loss.1} parent=1 // pred_region
      _
    $region5: #{medical_meta_loss.1} parent=1 // pred_fallthru
      _
    // Predicated region
    $region6: #{medical_meta_loss.1} parent=1 // pred_check
      _
    $region7: #{medical_meta_loss.1} parent=1 // pred_check_branch
      %13 = sbr.rel (0) target = $region9
    $region8: #{medical_meta_loss.1} parent=1 // pred_region
      _
    $region9: #{medical_meta_loss.1} parent=1 // pred_fallthru
      _
    // Predicated region
    $region10: #{medical_meta_loss.1} parent=1 // pred_check
      _
    $region11: #{medical_meta_loss.1} parent=1 // pred_check_branch
      %15 = sbr.rel (0) target = $region13
    $region12: #{medical_meta_loss.1} parent=1 // pred_region
      _
    $region13: #{medical_meta_loss.1} parent=1 // pred_fallthru
      _
    // Predicated region
    $region14: #{medical_meta_loss.1} parent=1 // pred_check
      _
    $region15: #{medical_meta_loss.1} parent=1 // pred_check_branch
      %17 = sbr.rel (0) target = $region17
    $region16: #{medical_meta_loss.1} parent=1 // pred_region
      _
    $region17: #{medical_meta_loss.1} parent=1 // pred_fallthru
      _
    %p18 = scmp.eq.s32.totalorder 0, 0
    // Predicated region
    $region18: #{medical_meta_loss.1} parent=1 // pred_check
      %p19 = pneg %p18
    $region19: #{medical_meta_loss.1} parent=1 // pred_check_branch
      %21 = sbr.rel (%p19) target = $region21
    $region20: #{medical_meta_loss.1} parent=1 // pred_region
      %s22 = scalar_lea.smem [#allocation2], 0
      %23 = sst [smem:[%s22]] 0.0
      %s24 = scalar_lea.smem [#allocation2], 1
      %25 = sst [smem:[%s24]] 0.0
      %s26 = scalar_lea.smem [#allocation2], 2
      %27 = sst [smem:[%s26]] 0.0
    $region21: #{medical_meta_loss.1} parent=1 // pred_fallthru
      _
    %v28 = vld [vmem:[%s0] sm:$0xff]
    %v29 = vld [vmem:[%s2] sm:$0xff]
    %v30 = vld [vmem:[%s3] sm:$0xff]
    %v31 = vlaneseq
    %v32 = vand.u32 %v31, 127
    %v33 = vmin.f32 %v28, 0.0
    %v34 = vand.u32 2147483647, %v28
    %v35 = vsub.f32 0.0, %v34
    %v36 = vmul.f32 %v35, 1.442695
    %v37 = vpow.pop %v36
    %v38 = vadd.f32 %v37, 1.0
    %v39 = vlog2.pop %v38
    %v40 = vmul.f32 %v39, 0.6931472
    %v41 = vmul.f32 -0.5, %v37
    %v42 = vadd.f32 %v41, 1.0
    %v43 = vmul.f32 %v42, %v37
    %v44 = vand.u32 2147483647, %v37
    %vm45 = vcmp.lt.f32.partialorder %v44, 0.0004427343
    %v46 = vsel %vm45, %v43, %v40
    %v47 = vsub.f32 %v33, %v46
    %v48 = vsub.f32 %v47, %v28
    %49 = vset.pattern.permute.xlu0 0
    %50 = vperm.xlu0 %49, %v29
    %v51 = vpop.permute.xlu0 %50
    %vm52 = vcmp.gt.s32.totalorder %v51, %v32
    %v53 = vsel %vm52, %v28, 0.0
    %v54 = vadd.f32 %v48, %v53
    %s55 = sld [smem:[#allocation2]]
    %vm56 = vcmask 777216
    %v57 = vsel %vm56, %v54, 0.0
    %58 = vadd.xlane.f32.xlu0 %v57
    %v59 = vpop.xlane.xlu0 %58
    %v60 = vrot.slane %v59, 4
    %v61 = vadd.f32 %v59, %v60
    %v62 = vrot.slane %v61, 2
    %v63 = vadd.f32 %v61, %v62
    %v64 = vrot.slane %v63, 1
    %v65 = vadd.f32 %v63, %v64
    %s66 = vtos %v65
    %s67 = ssub.f32 0.0, %s66
    %s68 = sadd.f32 %s55, %s67
    %s69 = scalar_lea.smem [#allocation2], 0
    %70 = sst [smem:[%s69]] %s68
    %v71 = vld [vmem:[%s1] sm:$0xff]
    %vm72 = vcmp.eq.s32.totalorder %v30, 1
    %74 = vrot.lane.b32.xlu0 %v71, 1
    %v75 = vpop.permute.xlu0 %74
    %v77 = vsub.f32 %v71, %v75
    %78 = vrot.lane.b32.xlu0 %v71, 127
    %v79 = vpop.permute.xlu0 %78
    %v81 = vsub.f32 %v71, %v79
    %83 = vrot.lane.b32.xlu0 %v77, 127
    %v84 = vpop.permute.xlu0 %83
    %v86 = vsel %vm72, %v84, %v81
    %v87 = vsub.f32 0.0, %v86
    %v88 = vmax.f32 %v87, 0.0
    %v89 = vand.u32 2147483647, %v86
    %v90 = vsub.f32 0.0, %v89
    %v91 = vmul.f32 %v90, 1.442695
    %v92 = vpow.pop %v91
    %v93 = vadd.f32 %v92, 1.0
    %v94 = vlog2.pop %v93
    %v95 = vmul.f32 %v94, 0.6931472
    %v96 = vmul.f32 -0.5, %v92
    %v97 = vadd.f32 %v96, 1.0
    %v98 = vmul.f32 %v97, %v92
    %v99 = vand.u32 2147483647, %v92
    %vm100 = vcmp.lt.f32.partialorder %v99, 0.0004427343
    %v101 = vsel %vm100, %v98, %v95
    %v102 = vadd.f32 %v88, %v101
    %vm103 = vcmp.ne.s32.totalorder %v30, 255
    %s104 = sld [smem:[#allocation2 + $0x1]]
    %v105 = vsel %vm103, %v102, 0.0
    %vm106 = vcmask 7168
    %v107 = vsel %vm106, %v105, 0.0
    %108 = vadd.xlane.f32.xlu0 %v107
    %v109 = vpop.xlane.xlu0 %108
    %v110 = vrot.slane %v109, 4
    %v111 = vadd.f32 %v109, %v110
    %v112 = vrot.slane %v111, 2
    %v113 = vadd.f32 %v111, %v112
    %v114 = vrot.slane %v113, 1
    %v115 = vadd.f32 %v113, %v114
    %s116 = vtos %v115
    %s117 = sadd.f32 %s104, %s116
    %s118 = scalar_lea.smem [#allocation2], 1
    %119 = sst [smem:[%s118]] %s117
    %s120 = sld [smem:[#allocation2 + $0x2]]
    %v121 = vsel %vm103, 1, 0
    %v122 = vcvt.s32.f32 %v121
    %v123 = vsel %vm106, %v122, 0.0
    %124 = vadd.xlane.f32.xlu0 %v123
    %v125 = vpop.xlane.xlu0 %124
    %v126 = vrot.slane %v125, 4
    %v127 = vadd.f32 %v125, %v126
    %v128 = vrot.slane %v127, 2
    %v129 = vadd.f32 %v127, %v128
    %v130 = vrot.slane %v129, 1
    %v131 = vadd.f32 %v129, %v130
    %s132 = vtos %v131
    %s133 = sadd.f32 %s120, %s132
    %s134 = scalar_lea.smem [#allocation2], 2
    %135 = sst [smem:[%s134]] %s133
    // Predicated region
    $region22: #{medical_meta_loss.1} parent=1 // pred_check
      %p136 = pneg %p18
    $region23: #{medical_meta_loss.1} parent=1 // pred_check_branch
      %138 = sbr.rel (%p136) target = $region25
    $region24: #{medical_meta_loss.1} parent=1 // pred_region
      %s139 = sld [smem:[#allocation2]]
      %s140 = smul.f32 %s139, 0.125
      %s141 = sld [smem:[#allocation2 + $0x1]]
      %s142 = sld [smem:[#allocation2 + $0x2]]
      %v143 = vstv %s142
      %v144 = vrcp.pop %v143
      %s145 = vtos %v144
      %s146 = smul.f32 %s141, %s145
      %s147 = smul.f32 %s146, 0.5
      %s148 = sadd.f32 %s140, %s147
      %s149 = scalar_lea.smem [#allocation3], 0
      %150 = sst [smem:[%s149]] %s148
      %s151 = scalar_lea.smem [#allocation3], 1
      %152 = sst [smem:[%s151]] %s140
      %s153 = scalar_lea.smem [#allocation3], 2
      %154 = sst [smem:[%s153]] %s147
    $region25: #{medical_meta_loss.1} parent=1 // pred_fallthru
      _
    // Predicated region
    $region26: #{medical_meta_loss.1} parent=1 // pred_check
      _
    $region27: #{medical_meta_loss.1} parent=1 // pred_check_branch
      %156 = sbr.rel (0) target = $region29
    $region28: #{medical_meta_loss.1} parent=1 // pred_region
      %s158 = ssub.s32 16, 16
      %159 = vsyncadd [#allocation4], %s158
      %s161 = sshll.u32 %s4, 4
      %s162 = int_to_ptr.vmem [resolvable:$true] %s161
      %164 = dma.smem_to_vmem [#allocation3], 16, %s162, [#allocation4]
    $region29: #{medical_meta_loss.1} parent=1 // pred_fallthru
      _
    // Predicated region
    $region30: #{medical_meta_loss.1} parent=1 // pred_check
      _
    $region31: #{medical_meta_loss.1} parent=1 // pred_check_branch
      %166 = sbr.rel (0) target = $region33
    $region32: #{medical_meta_loss.1} parent=1 // pred_region
      %167 = dma.done [#allocation4], 16
    $region33: #{medical_meta_loss.1} parent=1 // pred_fallthru
      _
    %168 = sfence
    %169 = vsyncpa [#allocation4], 1

</llo_original>
